<compile_context>
chip_gen: v5e
topology: v5e:2x2
jax: 0.10.0
libtpu: 0.0.40
codegen_flags: <defaults>
</compile_context>

<pallas_src>
import functools

import numpy as np
import jax
import jax.numpy as jnp
from jax import lax
from jax.experimental import pallas as pl
from jax.experimental.pallas import tpu as pltpu


def _round_up(x, m):
    return ((x + m - 1) // m) * m


# ----------------------------------------------------------------------------
# Kernel 1: (BN-folded) Linear -> tanh, tiled over (n_out, F)
# ----------------------------------------------------------------------------
def linear_tanh_kernel(x_ref, w_ref, b_ref, o_ref, acc_ref):
    k = pl.program_id(1)

    @pl.when(k == 0)
    def _():
        acc_ref[...] = jnp.zeros_like(acc_ref)

    acc_ref[...] += jnp.dot(x_ref[...], w_ref[...],
                            preferred_element_type=jnp.float32)

    @pl.when(k == pl.num_programs(1) - 1)
    def _():
        o_ref[...] = jnp.tanh(acc_ref[...] + b_ref[...])


# ----------------------------------------------------------------------------
# Kernel 2: batched per-sample covariance + min-variance portfolio QP (FISTA)
# ----------------------------------------------------------------------------
def cov_minvar_kernel(y_ref, w_ref, *, max_weight, n_steps=200, n_bisect=32):
    Y = y_ref[...]                                     # (SB, A, n_obs) — obs on lanes
    sb, n_assets, n_obs = Y.shape

    # CovarianceMatrix.compute_covariance: unbiased covariance over the 150 obs.
    mu = jnp.mean(Y, axis=2, keepdims=True)
    Yc = Y - mu
    sigma = lax.dot_general(Yc, Yc, (((2,), (2,)), ((0,), (0,))),
                            preferred_element_type=jnp.float32) / (n_obs - 1)
    # TODO(synk): torch.svd-based matrix sqrt (sqrt=True) has no Pallas equivalent;
    # it cancels exactly in the QP objective (sqrtm(Sigma)^T sqrtm(Sigma) == Sigma).

    # trace(Sigma) per sample via iota mask (no gather). trace >= lambda_max, so
    # eta = 1/(2*trace) <= 1/L with L = 2*lambda_max -> FISTA step is provably safe.
    ii = lax.broadcasted_iota(jnp.int32, sigma.shape, 1)
    jj = lax.broadcasted_iota(jnp.int32, sigma.shape, 2)
    trace = jnp.sum(jnp.where(ii == jj, sigma, 0.0), axis=(1, 2))       # (SB,)
    eta = (1.0 / (2.0 * (trace + 1e-8)))[:, None]                       # (SB, 1)

    cap = jnp.float32(max_weight)
    # TODO(synk): if max_weight * n_assets < 1 the feasible set is empty; the
    # projection then returns the closest clipped point with sum(w) < 1.

    def project(v):
        # Euclidean projection onto {w : sum(w)=1, 0<=w<=cap}, vectorized over SB,
        # via bisection on the shift tau (exact to fp32 after ~30 halvings).
        lo0 = jnp.min(v, axis=1, keepdims=True) - cap - 1.0
        hi0 = jnp.max(v, axis=1, keepdims=True) + 1.0

        def bisect(_, carry):
            lo, hi = carry
            tau = 0.5 * (lo + hi)
            s = jnp.sum(jnp.clip(v - tau, 0.0, cap), axis=1, keepdims=True)
            gt = s > 1.0
            return jnp.where(gt, tau, lo), jnp.where(gt, hi, tau)

        lo, hi = lax.fori_loop(0, n_bisect, bisect, (lo0, hi0))
        tau = 0.5 * (lo + hi)
        return jnp.clip(v - tau, 0.0, cap)

    # TODO(synk): the original layer is a cvxpylayers QP solve; we use FISTA
    # (accelerated projected gradient) on the identical QP -> same minimizer.
    w0 = jnp.full((sb, n_assets), 1.0 / n_assets, dtype=jnp.float32)

    def fista_step(_, carry):
        w, w_prev, t = carry
        t_next = 0.5 * (1.0 + jnp.sqrt(1.0 + 4.0 * t * t))
        z = w + ((t - 1.0) / t_next) * (w - w_prev)
        # Gradient 2*Sigma z as VPU broadcast-multiply + lane reduce (no MXU).
        g = 2.0 * jnp.sum(sigma * z[:, None, :], axis=2)
        w_new = project(z - eta * g)
        return w_new, w, t_next

    w, _, _ = lax.fori_loop(0, n_steps, fista_step, (w0, w0, jnp.float32(1.0)))
    w_ref[...] = w


# ----------------------------------------------------------------------------
# Wrapper
# ----------------------------------------------------------------------------
def densenet_minvar2_forward(x, params, *, max_weight, cov_n_rows=150,
                             compute_dtype=jnp.float32):
    B, C, L, A = x.shape
    F = C * L * A
    n_out = A * cov_n_rows
    eps = 1e-5

    x2 = x.reshape(B, F).astype(jnp.float32)

    # ---- Fold eval-mode BatchNorm1d into the Linear (static params) ----
    gamma = params["gamma"].astype(jnp.float32)
    beta = params["beta"].astype(jnp.float32)
    rmean = params["running_mean"].astype(jnp.float32)
    rvar = params["running_var"].astype(jnp.float32)
    W = params["weight"].astype(jnp.float32)            # (F, n_out) == torch weight.T
    bias = params["bias"].astype(jnp.float32)           # (n_out,)
    # Dropout is identity in eval mode.
    # TODO(synk): training-mode Dropout / batch-stat BatchNorm (stateful torch RNG)
    # has no deterministic Pallas equivalent; eval-mode semantics are implemented.

    scale = gamma / jnp.sqrt(rvar + eps)                 # (F,)
    W_fold = W * scale[:, None]
    b_fold = bias + (beta - rmean * scale) @ W

    # ---- Permute output columns so the result reshapes to (B, A, cov_n_rows) ----
    # (assets on sublanes, observations on lanes for kernel 2).
    perm = np.arange(n_out).reshape(cov_n_rows, A).T.reshape(-1)
    W_fold = W_fold[:, perm]
    b_fold = b_fold[perm]

    # ---- Lane-dense padding + tile sizes (generation-safe VMEM footprint) ----
    TN_MAX, TK_MAX = 1024, 512
    tn = min(TN_MAX, _round_up(n_out, 128))
    tk = min(TK_MAX, _round_up(F, 128))
    n_out_pad = _round_up(n_out, tn)
    f_pad = _round_up(F, tk)

    x_pad = jnp.pad(x2, ((0, 0), (0, f_pad - F)))
    W_pad = jnp.pad(W_fold, ((0, f_pad - F), (0, n_out_pad - n_out)))
    b_pad = jnp.pad(b_fold, (0, n_out_pad - n_out)).reshape(1, n_out_pad)

    # Optional bf16 weight/activation streaming (numerics tradeoff vs f32 torch ref);
    # accumulation stays f32 via preferred_element_type.
    if compute_dtype != jnp.float32:
        x_pad = x_pad.astype(compute_dtype)
        W_pad = W_pad.astype(compute_dtype)

    grid = (n_out_pad // tn, f_pad // tk)

    h = pl.pallas_call(
        linear_tanh_kernel,
        out_shape=jax.ShapeDtypeStruct((B, n_out_pad), jnp.float32),
        grid_spec=pltpu.PrefetchScalarGridSpec(
            num_scalar_prefetch=0,
            grid=grid,
            in_specs=[
                pl.BlockSpec((B, tk), lambda j, k: (0, k)),
                pl.BlockSpec((tk, tn), lambda j, k: (k, j)),
                pl.BlockSpec((1, tn), lambda j, k: (0, j)),
            ],
            out_specs=pl.BlockSpec((B, tn), lambda j, k: (0, j)),
            scratch_shapes=[pltpu.VMEM((B, tn), jnp.float32)],
        ),
        compiler_params=pltpu.CompilerParams(
            dimension_semantics=("parallel", "arbitrary"),
            vmem_limit_bytes=48 * 1024 * 1024,
        ),
    )(x_pad, W_pad, b_pad)

    # Strip padding; thanks to the host column permutation this is
    # torch's y.view(B, cov_n_rows, A) transposed to (B, A, cov_n_rows).
    y3 = h[:, :n_out].reshape(B, A, cov_n_rows)

    # ---- Kernel 2: batch SB samples per grid step ----
    SB = 8
    b_pad2 = _round_up(B, SB)
    if b_pad2 != B:
        y3 = jnp.pad(y3, ((0, b_pad2 - B), (0, 0), (0, 0)))

    w = pl.pallas_call(
        functools.partial(cov_minvar_kernel, max_weight=max_weight),
        out_shape=jax.ShapeDtypeStruct((b_pad2, A), jnp.float32),
        grid=(b_pad2 // SB,),
        in_specs=[pl.BlockSpec((SB, A, cov_n_rows), lambda b: (b, 0, 0))],
        out_specs=pl.BlockSpec((SB, A), lambda b: (b, 0)),
        compiler_params=pltpu.CompilerParams(dimension_semantics=("parallel",)),
    )(y3)

    return w[:B]


# ----------------------------------------------------------------------------
# Demo / smoke test
# ----------------------------------------------------------------------------
if __name__ == "__main__":
    key = jax.random.PRNGKey(0)
    B, C, L, A = 2, 2, 8, 4          # batch, n_channels, lookback, n_assets
    cov_n_rows = 150                 # hard-coded in the module's __init__
    max_weight = 0.5
    F = C * L * A
    n_out = A * cov_n_rows

    ks = jax.random.split(key, 8)
    x = jax.random.normal(ks[0], (B, C, L, A), jnp.float32)

    # Deterministic synthetic parameters (shapes from the module's __init__).
    params = {
        "gamma": 1.0 + 0.1 * jax.random.normal(ks[1], (F,), jnp.float32),
        "beta": 0.1 * jax.random.normal(ks[2], (F,), jnp.float32),
        "running_mean": 0.1 * jax.random.normal(ks[3], (F,), jnp.float32),
        "running_var": 1.0 + 0.2 * jax.random.uniform(ks[4], (F,), jnp.float32),
        # torch Linear weight is (out, in); we store its transpose (in, out).
        "weight": jax.random.normal(ks[5], (F, n_out), jnp.float32) / jnp.sqrt(F),
        "bias": 0.01 * jax.random.normal(ks[6], (n_out,), jnp.float32),
    }

    weights = densenet_minvar2_forward(x, params, max_weight=max_weight,
                                       cov_n_rows=cov_n_rows)
    weights = jax.block_until_ready(weights)

    w_np = np.asarray(weights)
    assert w_np.shape == (B, A)
    assert np.all(np.isfinite(w_np))
    assert np.all(w_np >= -1e-4) and np.all(w_np <= max_weight + 1e-4)
    assert np.allclose(w_np.sum(axis=1), 1.0, atol=1e-3)

    print("KERNEL_OK")
</pallas_src>

<mosaic_0001>
module attributes {stable_mosaic.version = 11 : i64} {
  func.func @linear_tanh_kernel(%arg0: i32, %arg1: i32, %arg2: memref<2x128xf32, #tpu.memory_space<vmem>>, %arg3: memref<128x640xf32, #tpu.memory_space<vmem>>, %arg4: memref<1x640xf32, #tpu.memory_space<vmem>>, %arg5: memref<2x640xf32, #tpu.memory_space<vmem>>, %arg6: memref<2x640xf32, #tpu.memory_space<vmem>>) attributes {dimension_semantics = [#tpu.dimension_semantics<parallel>, #tpu.dimension_semantics<arbitrary>], iteration_bounds = array<i64: 1, 1>, scalar_prefetch = 0 : i64, scratch_operands = 1 : i64, tpu.core_type = #tpu.core_type<tc>, window_params = [{transform_indices = @transform_0, window_bounds = array<i64: 2, 128>}, {transform_indices = @transform_1, window_bounds = array<i64: 128, 640>}, {transform_indices = @transform_2, window_bounds = array<i64: 1, 640>}, {transform_indices = @transform_3, window_bounds = array<i64: 2, 640>}]} {
    %c0_i32 = arith.constant 0 : i32
    %0 = arith.cmpi eq, %arg1, %c0_i32 : i32
    %1 = arith.extui %0 : i1 to i32
    %c0_i32_0 = arith.constant 0 : i32
    %2 = arith.cmpi ne, %1, %c0_i32_0 : i32
    scf.if %2 {
      %cst_10 = arith.constant 0.000000e+00 : f32
      %12 = vector.broadcast %cst_10 : f32 to vector<2x640xf32>
      %c0_11 = arith.constant 0 : index
      %c0_12 = arith.constant 0 : index
      %13 = vector.load %arg6[%c0_11, %c0_12] : memref<2x640xf32, #tpu.memory_space<vmem>>, vector<2x640xf32>
      tpu.vector_store %arg6[%c0_11, %c0_12], %12 {strides = array<i32>} : memref<2x640xf32, #tpu.memory_space<vmem>>, vector<2x640xf32>,
    } else {
    }
    %c0 = arith.constant 0 : index
    %c0_1 = arith.constant 0 : index
    %3 = vector.load %arg6[%c0, %c0_1] : memref<2x640xf32, #tpu.memory_space<vmem>>, vector<2x640xf32>
    %c0_2 = arith.constant 0 : index
    %c0_3 = arith.constant 0 : index
    %4 = vector.load %arg2[%c0_2, %c0_3] : memref<2x128xf32, #tpu.memory_space<vmem>>, vector<2x128xf32>
    %c0_4 = arith.constant 0 : index
    %c0_5 = arith.constant 0 : index
    %5 = vector.load %arg3[%c0_4, %c0_5] : memref<128x640xf32, #tpu.memory_space<vmem>>, vector<128x640xf32>
    %cst = arith.constant dense<0.000000e+00> : vector<2x640xf32>
    %6 = tpu.matmul %4, %5, %cst {dimension_numbers = #tpu.dot_dimension_numbers<[1], [0], [0], [1], [0, 0, 1, 1], [], []>} : vector<2x128xf32>, vector<128x640xf32>, vector<2x640xf32> -> vector<2x640xf32>
    %7 = arith.addf %3, %6 : vector<2x640xf32>
    %c0_6 = arith.constant 0 : index
    %c0_7 = arith.constant 0 : index
    %8 = vector.load %arg6[%c0_6, %c0_7] : memref<2x640xf32, #tpu.memory_space<vmem>>, vector<2x640xf32>
    tpu.vector_store %arg6[%c0_6, %c0_7], %7 {strides = array<i32>} : memref<2x640xf32, #tpu.memory_space<vmem>>, vector<2x640xf32>,
    %c0_i32_8 = arith.constant 0 : i32
    %9 = arith.cmpi eq, %arg1, %c0_i32_8 : i32
    %10 = arith.extui %9 : i1 to i32
    %c0_i32_9 = arith.constant 0 : i32
    %11 = arith.cmpi ne, %10, %c0_i32_9 : i32
    scf.if %11 {
      %c0_10 = arith.constant 0 : index
      %c0_11 = arith.constant 0 : index
      %12 = vector.load %arg6[%c0_10, %c0_11] : memref<2x640xf32, #tpu.memory_space<vmem>>, vector<2x640xf32>
      %c0_12 = arith.constant 0 : index
      %c0_13 = arith.constant 0 : index
      %13 = vector.load %arg4[%c0_12, %c0_13] : memref<1x640xf32, #tpu.memory_space<vmem>>, vector<1x640xf32>
      %14 = vector.broadcast %13 : vector<1x640xf32> to vector<2x640xf32>
      %15 = arith.addf %12, %14 : vector<2x640xf32>
      %16 = math.tanh %15 : vector<2x640xf32>
      %c0_14 = arith.constant 0 : index
      %c0_15 = arith.constant 0 : index
      %17 = vector.load %arg5[%c0_14, %c0_15] : memref<2x640xf32, #tpu.memory_space<vmem>>, vector<2x640xf32>
      tpu.vector_store %arg5[%c0_14, %c0_15], %16 {strides = array<i32>} : memref<2x640xf32, #tpu.memory_space<vmem>>, vector<2x640xf32>,
    } else {
    }
    return
  }
  func.func @transform_0(%arg0: i32, %arg1: i32) -> (i32, i32) {
    %c0_i32 = arith.constant 0 : i32
    %c0_i32_0 = arith.constant 0 : i32
    return %c0_i32, %arg1 : i32, i32
  }
  func.func @transform_1(%arg0: i32, %arg1: i32) -> (i32, i32) {
    %c0_i32 = arith.constant 0 : i32
    return %arg1, %arg0 : i32, i32
  }
  func.func @transform_2(%arg0: i32, %arg1: i32) -> (i32, i32) {
    %c0_i32 = arith.constant 0 : i32
    %c0_i32_0 = arith.constant 0 : i32
    return %c0_i32, %arg0 : i32, i32
  }
  func.func @transform_3(%arg0: i32, %arg1: i32) -> (i32, i32) {
    %c0_i32 = arith.constant 0 : i32
    %c0_i32_0 = arith.constant 0 : i32
    return %c0_i32, %arg0 : i32, i32
  }
}

</mosaic_0001>

<llo_original>
// kernel: tpu_custom_call.1
$region0: #{tpu_custom_call.1}
  #allocation0 [shape = 'u32[]', space=smem, size = 0x4, offset = 0x4, fixed_abs, tag = 'smem constant byte address 0x4 - core index']
  #allocation1 [shape = 'u32[72,128]{1,0:T(1,128)}', space=vmem, size = 0x9000, scoped, tag = 'internal scratch']
  #allocation2 [shape = 'f32[2,640]{1,0:T(2,128)}', space=vmem, size = 0x1400, scoped, tag = 'scratch operand']
  %s0 = inlined_call_operand.hbm [shape: f32[2,128], index: 0, kind: input, shape index: {}]
  %s1 = inlined_call_operand.hbm [shape: f32[128,640], index: 1, kind: input, shape index: {}]
  %s2 = inlined_call_operand.hbm [shape: f32[1,640], index: 2, kind: input, shape index: {}]
  %s3 = inlined_call_operand.hbm [shape: f32[2,640], index: 3, kind: output, shape index: {}]
  %s4 = sld [smem:[#allocation0]]
  $region42: #{tpu_custom_call.1} parent=0
    _
  %s6 = ssub.s32 1, %s4
  %s7 = scalar_select 0, %s6, %s4
  $region1: #{tpu_custom_call.1} parent=0
    #allocation3 [shape = 'u8[1024]{0}', space=vmem, size = 0x400, scoped, tag = 'input window, operand 0, single buffered']
    #allocation4 [shape = 's32[1]{0}', space=sflag, size = 0x4, scoped, tag = 'scoped memory for tpu_custom_call.1']
    #allocation5 [shape = 's32[1]{0}', space=sflag, size = 0x4, scoped, tag = 'scoped memory for tpu_custom_call.1']
    #allocation6 [shape = 'u8[327680]{0}', space=vmem, size = 0x50000, scoped, tag = 'input window, operand 1, single buffered']
    #allocation7 [shape = 's32[1]{0}', space=sflag, size = 0x4, scoped, tag = 'scoped memory for tpu_custom_call.1']
    #allocation8 [shape = 'u8[2560]{0}', space=vmem, size = 0xc00, scoped, tag = 'input window, operand 2, single buffered']
    #allocation9 [shape = 'u8[5120]{0}', space=vmem, size = 0x1400, scoped, tag = 'output window, operand 0, single buffered']
    %8 = vsyncpa [#allocation4], 0
    %9 = vsyncpa [#allocation7], 0
    %10 = vsyncpa [#allocation5], 0
    // Predicated region
    $region2: #{tpu_custom_call.1} parent=1 // pred_check
      _
    $region3: #{tpu_custom_call.1} parent=1 // pred_check_branch
      %12 = sbr.rel (0) target = $region5
    $region4: #{tpu_custom_call.1} parent=1 // pred_region
      %14 = vsyncadd [#allocation4], 0
      %s16 = sshll.u32 %s0, 4
      %s17 = int_to_ptr.hbm [resolvable:$true] %s16
      %s18 = sshll.u32 [#allocation3], 4
      %s19 = int_to_ptr.vmem [resolvable:$true] %s18
      %21 = dma.hbm_to_vmem [thread:$0]  %s17, 32, %s19, [#allocation4]
    $region5: #{tpu_custom_call.1} parent=1 // pred_fallthru
      _
    // Predicated region
    $region6: #{tpu_custom_call.1} parent=1 // pred_check
      _
    $region7: #{tpu_custom_call.1} parent=1 // pred_check_branch
      %23 = sbr.rel (0) target = $region9
    $region8: #{tpu_custom_call.1} parent=1 // pred_region
      %25 = vsyncadd [#allocation7], 0
      %s26 = sshll.u32 %s1, 4
      %s27 = int_to_ptr.hbm [resolvable:$true] %s26
      %s28 = sshll.u32 [#allocation6], 4
      %s29 = int_to_ptr.vmem [resolvable:$true] %s28
      %34 = dma.hbm_to_vmem [thread:$0]  %s27, 10240, %s29, [#allocation7], 640, 640, 40
    $region9: #{tpu_custom_call.1} parent=1 // pred_fallthru
      _
    // Predicated region
    $region10: #{tpu_custom_call.1} parent=1 // pred_check
      _
    $region11: #{tpu_custom_call.1} parent=1 // pred_check_branch
      %36 = sbr.rel (0) target = $region13
    $region12: #{tpu_custom_call.1} parent=1 // pred_region
      %38 = vsyncadd [#allocation7], 0
      %s40 = sshll.u32 %s2, 4
      %s41 = int_to_ptr.hbm [resolvable:$true] %s40
      %s42 = sshll.u32 [#allocation8], 4
      %s43 = int_to_ptr.vmem [resolvable:$true] %s42
      %45 = dma.hbm_to_vmem [thread:$0]  %s41, 80, %s43, [#allocation7]
    $region13: #{tpu_custom_call.1} parent=1 // pred_fallthru
      _
    // Predicated region
    $region14: #{tpu_custom_call.1} parent=1 // pred_check
      _
    $region15: #{tpu_custom_call.1} parent=1 // pred_check_branch
      %47 = sbr.rel (0) target = $region17
    $region16: #{tpu_custom_call.1} parent=1 // pred_region
      %49 = dma.done [#allocation4], 32
    $region17: #{tpu_custom_call.1} parent=1 // pred_fallthru
      _
    // Predicated region
    $region18: #{tpu_custom_call.1} parent=1 // pred_check
      _
    $region19: #{tpu_custom_call.1} parent=1 // pred_check_branch
      %51 = sbr.rel (0) target = $region21
    $region20: #{tpu_custom_call.1} parent=1 // pred_region
      %53 = dma.done [#allocation7], 10240
    $region21: #{tpu_custom_call.1} parent=1 // pred_fallthru
      _
    // Predicated region
    $region22: #{tpu_custom_call.1} parent=1 // pred_check
      _
    $region23: #{tpu_custom_call.1} parent=1 // pred_check_branch
      %55 = sbr.rel (0) target = $region25
    $region24: #{tpu_custom_call.1} parent=1 // pred_region
      %57 = dma.done [#allocation7], 80
    $region25: #{tpu_custom_call.1} parent=1 // pred_fallthru
      _
    %p58 = scmp.eq.s32.totalorder 0, 0
    // Predicated region
    $region26: #{tpu_custom_call.1} parent=1 // pred_check
      %p59 = pneg %p58
    $region27: #{tpu_custom_call.1} parent=1 // pred_check_branch
      %61 = sbr.rel (%p59) target = $region29
    $region28: #{tpu_custom_call.1} parent=1 // pred_region
      %62 = vst [vmem:[#allocation2] sm:$0xff] 0.0
      %63 = vst [vmem:[#allocation2 + $0x8] sm:$0x3] 0.0
    $region29: #{tpu_custom_call.1} parent=1 // pred_fallthru
      _
    %v64 = vld [vmem:[#allocation2] sm:$0xff]
    %v65 = vld [vmem:[#allocation2 + $0x8] sm:$0x3]
    %v66 = vld [vmem:[#allocation3] sm:$0x3]
    %v67 = vld [vmem:[#allocation6] sm:$0xff]
    %v68 = vld [vmem:[#allocation6 + $0x8] sm:$0xff]
    %v69 = vld [vmem:[#allocation6 + $0x10] sm:$0xff]
    %v70 = vld [vmem:[#allocation6 + $0x18] sm:$0xff]
    %v71 = vld [vmem:[#allocation6 + $0x20] sm:$0xff]
    %v72 = vld [vmem:[#allocation6 + $0x28] sm:$0xff]
    %v73 = vld [vmem:[#allocation6 + $0x30] sm:$0xff]
    %v74 = vld [vmem:[#allocation6 + $0x38] sm:$0xff]
    %v75 = vld [vmem:[#allocation6 + $0x40] sm:$0xff]
    %v76 = vld [vmem:[#allocation6 + $0x48] sm:$0xff]
    %v77 = vld [vmem:[#allocation6 + $0x50] sm:$0xff]
    %v78 = vld [vmem:[#allocation6 + $0x58] sm:$0xff]
    %v79 = vld [vmem:[#allocation6 + $0x60] sm:$0xff]
    %v80 = vld [vmem:[#allocation6 + $0x68] sm:$0xff]
    %v81 = vld [vmem:[#allocation6 + $0x70] sm:$0xff]
    %v82 = vld [vmem:[#allocation6 + $0x78] sm:$0xff]
    %v83 = vld [vmem:[#allocation6 + $0x80] sm:$0xff]
    %v84 = vld [vmem:[#allocation6 + $0x88] sm:$0xff]
    %v85 = vld [vmem:[#allocation6 + $0x90] sm:$0xff]
    %v86 = vld [vmem:[#allocation6 + $0x98] sm:$0xff]
    %v87 = vld [vmem:[#allocation6 + $0xa0] sm:$0xff]
    %v88 = vld [vmem:[#allocation6 + $0xa8] sm:$0xff]
    %v89 = vld [vmem:[#allocation6 + $0xb0] sm:$0xff]
    %v90 = vld [vmem:[#allocation6 + $0xb8] sm:$0xff]
    %v91 = vld [vmem:[#allocation6 + $0xc0] sm:$0xff]
    %v92 = vld [vmem:[#allocation6 + $0xc8] sm:$0xff]
    %v93 = vld [vmem:[#allocation6 + $0xd0] sm:$0xff]
    %v94 = vld [vmem:[#allocation6 + $0xd8] sm:$0xff]
    %v95 = vld [vmem:[#allocation6 + $0xe0] sm:$0xff]
    %v96 = vld [vmem:[#allocation6 + $0xe8] sm:$0xff]
    %v97 = vld [vmem:[#allocation6 + $0xf0] sm:$0xff]
    %v98 = vld [vmem:[#allocation6 + $0xf8] sm:$0xff]
    %v99 = vld [vmem:[#allocation6 + $0x100] sm:$0xff]
    %v100 = vld [vmem:[#allocation6 + $0x108] sm:$0xff]
    %v101 = vld [vmem:[#allocation6 + $0x110] sm:$0xff]
    %v102 = vld [vmem:[#allocation6 + $0x118] sm:$0xff]
    %v103 = vld [vmem:[#allocation6 + $0x120] sm:$0xff]
    %v104 = vld [vmem:[#allocation6 + $0x128] sm:$0xff]
    %v105 = vld [vmem:[#allocation6 + $0x130] sm:$0xff]
    %v106 = vld [vmem:[#allocation6 + $0x138] sm:$0xff]
    %v107 = vld [vmem:[#allocation6 + $0x140] sm:$0xff]
    %v108 = vld [vmem:[#allocation6 + $0x148] sm:$0xff]
    %v109 = vld [vmem:[#allocation6 + $0x150] sm:$0xff]
    %v110 = vld [vmem:[#allocation6 + $0x158] sm:$0xff]
    %v111 = vld [vmem:[#allocation6 + $0x160] sm:$0xff]
    %v112 = vld [vmem:[#allocation6 + $0x168] sm:$0xff]
    %v113 = vld [vmem:[#allocation6 + $0x170] sm:$0xff]
    %v114 = vld [vmem:[#allocation6 + $0x178] sm:$0xff]
    %v115 = vld [vmem:[#allocation6 + $0x180] sm:$0xff]
    %v116 = vld [vmem:[#allocation6 + $0x188] sm:$0xff]
    %v117 = vld [vmem:[#allocation6 + $0x190] sm:$0xff]
    %v118 = vld [vmem:[#allocation6 + $0x198] sm:$0xff]
    %v119 = vld [vmem:[#allocation6 + $0x1a0] sm:$0xff]
    %v120 = vld [vmem:[#allocation6 + $0x1a8] sm:$0xff]
    %v121 = vld [vmem:[#allocation6 + $0x1b0] sm:$0xff]
    %v122 = vld [vmem:[#allocation6 + $0x1b8] sm:$0xff]
    %v123 = vld [vmem:[#allocation6 + $0x1c0] sm:$0xff]
    %v124 = vld [vmem:[#allocation6 + $0x1c8] sm:$0xff]
    %v125 = vld [vmem:[#allocation6 + $0x1d0] sm:$0xff]
    %v126 = vld [vmem:[#allocation6 + $0x1d8] sm:$0xff]
    %v127 = vld [vmem:[#allocation6 + $0x1e0] sm:$0xff]
    %v128 = vld [vmem:[#allocation6 + $0x1e8] sm:$0xff]
    %v129 = vld [vmem:[#allocation6 + $0x1f0] sm:$0xff]
    %v130 = vld [vmem:[#allocation6 + $0x1f8] sm:$0xff]
    %v131 = vld [vmem:[#allocation6 + $0x200] sm:$0xff]
    %v132 = vld [vmem:[#allocation6 + $0x208] sm:$0xff]
    %v133 = vld [vmem:[#allocation6 + $0x210] sm:$0xff]
    %v134 = vld [vmem:[#allocation6 + $0x218] sm:$0xff]
    %v135 = vld [vmem:[#allocation6 + $0x220] sm:$0xff]
    %v136 = vld [vmem:[#allocation6 + $0x228] sm:$0xff]
    %v137 = vld [vmem:[#allocation6 + $0x230] sm:$0xff]
    %v138 = vld [vmem:[#allocation6 + $0x238] sm:$0xff]
    %v139 = vld [vmem:[#allocation6 + $0x240] sm:$0xff]
    %v140 = vld [vmem:[#allocation6 + $0x248] sm:$0xff]
    %v141 = vld [vmem:[#allocation6 + $0x250] sm:$0xff]
    %v142 = vld [vmem:[#allocation6 + $0x258] sm:$0xff]
    %v143 = vld [vmem:[#allocation6 + $0x260] sm:$0xff]
    %v144 = vld [vmem:[#allocation6 + $0x268] sm:$0xff]
    %v145 = vld [vmem:[#allocation6 + $0x270] sm:$0xff]
    %v146 = vld [vmem:[#allocation6 + $0x278] sm:$0xff]
    %147 = vmatpush.msra.mxu0 %v142
    %148 = vmatpush.msra.mxu0 %v137
    %149 = vmatpush.msra.mxu0 %v132
    %150 = vmatpush.msra.mxu0 %v127
    %151 = vmatpush.msra.mxu0 %v122
    %152 = vmatpush.msra.mxu0 %v117
    %153 = vmatpush.msra.mxu0 %v112
    %154 = vmatpush.msra.mxu0 %v107
    %155 = vmatpush.msra.mxu0 %v102
    %156 = vmatpush.msra.mxu0 %v97
    %157 = vmatpush.msra.mxu0 %v92
    %158 = vmatpush.msra.mxu0 %v87
    %159 = vmatpush.msra.mxu0 %v82
    %160 = vmatpush.msra.mxu0 %v77
    %161 = vmatpush.msra.mxu0 %v72
    %162 = vmatpush.msra.mxu0 %v67
    %163 = vmatmul.f32.gmra.mxu0 %v66
    %v164 = vpop.f32.mrf.mxu0
    %v165 = vadd.f32 0.0, %v164
    %166 = vdwg.mxu0
    %167 = vmatpush.msra.mxu0 %v143
    %168 = vmatpush.msra.mxu0 %v138
    %169 = vmatpush.msra.mxu0 %v133
    %170 = vmatpush.msra.mxu0 %v128
    %171 = vmatpush.msra.mxu0 %v123
    %172 = vmatpush.msra.mxu0 %v118
    %173 = vmatpush.msra.mxu0 %v113
    %174 = vmatpush.msra.mxu0 %v108
    %175 = vmatpush.msra.mxu0 %v103
    %176 = vmatpush.msra.mxu0 %v98
    %177 = vmatpush.msra.mxu0 %v93
    %178 = vmatpush.msra.mxu0 %v88
    %179 = vmatpush.msra.mxu0 %v83
    %180 = vmatpush.msra.mxu0 %v78
    %181 = vmatpush.msra.mxu0 %v73
    %182 = vmatpush.msra.mxu0 %v68
    %183 = vmatmul.f32.gmra.mxu0 %v66
    %v184 = vpop.f32.mrf.mxu0
    %v185 = vadd.f32 0.0, %v184
    %186 = vdwg.mxu0
    %187 = vmatpush.msra.mxu0 %v144
    %188 = vmatpush.msra.mxu0 %v139
    %189 = vmatpush.msra.mxu0 %v134
    %190 = vmatpush.msra.mxu0 %v129
    %191 = vmatpush.msra.mxu0 %v124
    %192 = vmatpush.msra.mxu0 %v119
    %193 = vmatpush.msra.mxu0 %v114
    %194 = vmatpush.msra.mxu0 %v109
    %195 = vmatpush.msra.mxu0 %v104
    %196 = vmatpush.msra.mxu0 %v99
    %197 = vmatpush.msra.mxu0 %v94
    %198 = vmatpush.msra.mxu0 %v89
    %199 = vmatpush.msra.mxu0 %v84
    %200 = vmatpush.msra.mxu0 %v79
    %201 = vmatpush.msra.mxu0 %v74
    %202 = vmatpush.msra.mxu0 %v69
    %203 = vmatmul.f32.gmra.mxu0 %v66
    %v204 = vpop.f32.mrf.mxu0
    %v205 = vadd.f32 0.0, %v204
    %206 = vdwg.mxu0
    %207 = vmatpush.msra.mxu0 %v145
    %208 = vmatpush.msra.mxu0 %v140
    %209 = vmatpush.msra.mxu0 %v135
    %210 = vmatpush.msra.mxu0 %v130
    %211 = vmatpush.msra.mxu0 %v125
    %212 = vmatpush.msra.mxu0 %v120
    %213 = vmatpush.msra.mxu0 %v115
    %214 = vmatpush.msra.mxu0 %v110
    %215 = vmatpush.msra.mxu0 %v105
    %216 = vmatpush.msra.mxu0 %v100
    %217 = vmatpush.msra.mxu0 %v95
    %218 = vmatpush.msra.mxu0 %v90
    %219 = vmatpush.msra.mxu0 %v85
    %220 = vmatpush.msra.mxu0 %v80
    %221 = vmatpush.msra.mxu0 %v75
    %222 = vmatpush.msra.mxu0 %v70
    %223 = vmatmul.f32.gmra.mxu0 %v66
    %v224 = vpop.f32.mrf.mxu0
    %v225 = vadd.f32 0.0, %v224
    %226 = vdwg.mxu0
    %227 = vmatpush.msra.mxu0 %v146
    %228 = vmatpush.msra.mxu0 %v141
    %229 = vmatpush.msra.mxu0 %v136
    %230 = vmatpush.msra.mxu0 %v131
    %231 = vmatpush.msra.mxu0 %v126
    %232 = vmatpush.msra.mxu0 %v121
    %233 = vmatpush.msra.mxu0 %v116
    %234 = vmatpush.msra.mxu0 %v111
    %235 = vmatpush.msra.mxu0 %v106
    %236 = vmatpush.msra.mxu0 %v101
    %237 = vmatpush.msra.mxu0 %v96
    %238 = vmatpush.msra.mxu0 %v91
    %239 = vmatpush.msra.mxu0 %v86
    %240 = vmatpush.msra.mxu0 %v81
    %241 = vmatpush.msra.mxu0 %v76
    %242 = vmatpush.msra.mxu0 %v71
    %243 = vmatmul.f32.gmra.mxu0 %v66
    %v244 = vpop.f32.mrf.mxu0
    %v245 = vadd.f32 0.0, %v244
    %246 = vdwg.mxu0
    %v251 = vrot.slane %v185, 6
    %v252 = vrot.slane %v205, 4
    %v253 = vrot.slane %v225, 2
    %vm254 = vcmask 1041408
    %v255 = vsel %vm254, %v165, %v251
    %vm256 = vcmask 1045508
    %v257 = vsel %vm256, %v252, %v253
    %vm258 = vcmask 1043456
    %v259 = vsel %vm258, %v255, %v257
    %v261 = vadd.f32 %v64, %v259
    %v262 = vadd.f32 %v65, %v245
    %263 = vst [vmem:[#allocation2] sm:$0xff] %v261
    %264 = vst [vmem:[#allocation2 + $0x8] sm:$0x3] %v262
    // Predicated region
    $region30: #{tpu_custom_call.1} parent=1 // pred_check
      %p265 = pneg %p58
    $region31: #{tpu_custom_call.1} parent=1 // pred_check_branch
      %267 = sbr.rel (%p265) target = $region33
    $region32: #{tpu_custom_call.1} parent=1 // pred_region
      %v268 = vld [vmem:[#allocation2] sm:$0xff]
      %v269 = vld [vmem:[#allocation2 + $0x8] sm:$0x3]
      %v270 = vld [vmem:[#allocation8] sm:$0x1f]
      %v272 = vperm.slane %v270, 0
      %v273 = vperm.slane %v270, 1
      %v274 = vperm.slane %v270, 2
      %v275 = vperm.slane %v270, 3
      %v276 = vperm.slane %v270, 4
      %v278 = vrot.slane %v273, 6
      %v279 = vrot.slane %v274, 4
      %v280 = vrot.slane %v275, 2
      %v281 = vsel %vm254, %v272, %v278
      %v282 = vsel %vm256, %v279, %v280
      %v283 = vsel %vm258, %v281, %v282
      %v285 = vadd.f32 %v268, %v283
      %v286 = vadd.f32 %v269, %v276
      %v287 = vtanh.pop %v285
      %v288 = vtanh.pop %v286
      %289 = vst [vmem:[#allocation9] sm:$0xff] %v287
      %290 = vst [vmem:[#allocation9 + $0x8] sm:$0x3] %v288
    $region33: #{tpu_custom_call.1} parent=1 // pred_fallthru
      _
    // Predicated region
    $region34: #{tpu_custom_call.1} parent=1 // pred_check
      _
    $region35: #{tpu_custom_call.1} parent=1 // pred_check_branch
      %292 = sbr.rel (0) target = $region37
    $region36: #{tpu_custom_call.1} parent=1 // pred_region
      %294 = vsyncadd [#allocation5], 0
      %s296 = sshll.u32 [#allocation9], 4
      %s297 = int_to_ptr.vmem [resolvable:$true] %s296
      %s298 = sshll.u32 %s3, 4
      %s299 = int_to_ptr.hbm [resolvable:$true] %s298
      %301 = dma.vmem_to_hbm [thread:$0]  %s297, 160, %s299, [#allocation5]
    $region37: #{tpu_custom_call.1} parent=1 // pred_fallthru
      _
    // Predicated region
    $region38: #{tpu_custom_call.1} parent=1 // pred_check
      _
    $region39: #{tpu_custom_call.1} parent=1 // pred_check_branch
      %303 = sbr.rel (0) target = $region41
    $region40: #{tpu_custom_call.1} parent=1 // pred_region
      %305 = dma.done [#allocation5], 160
    $region41: #{tpu_custom_call.1} parent=1 // pred_fallthru
      _
    %306 = vsyncpa [#allocation4], 1
    %307 = vsyncpa [#allocation7], 1
    %308 = vsyncpa [#allocation5], 1

</llo_original>
